<compile_context>
chip_gen: v6e
topology: v6e:2x2x1
jax: 0.10.0
libtpu: 0.0.40
codegen_flags: <defaults>
</compile_context>

<pallas_src>
import functools
import math

import jax
import jax.numpy as jnp
from jax.experimental import pallas as pl
from jax.experimental.pallas import tpu as pltpu


def make_positional_encoding(d_model: int, length: int) -> jnp.ndarray:
    """Sinusoidal table rows [0, length), identical to the PyTorch __init__."""
    position = jnp.arange(0, length, dtype=jnp.float32)[:, None]             # (length, 1)
    div_term = jnp.exp(
        jnp.arange(0, d_model, 2, dtype=jnp.float32) * (-math.log(10000.0) / d_model)
    )                                                                        # (ceil(D/2),)
    enc = jnp.zeros((length, d_model), dtype=jnp.float32)
    enc = enc.at[:, 0::2].set(jnp.sin(position * div_term))
    # Slice div_term so odd d_model also works (guards the naive-port mismatch).
    enc = enc.at[:, 1::2].set(jnp.cos(position * div_term[: d_model // 2]))
    return enc                                                               # (length, d_model)


def _pos_enc_add_kernel(x_ref, enc_ref, o_ref, *, row_tile, enc_resident):
    # x_ref / o_ref: (row_tile, L) tile of one batch's flattened (Rb, L) slab.
    # enc_ref: the flattened+padded table — either the whole VMEM-resident
    # array (sliced here) or the already-matching streamed tile.
    if enc_resident:
        s = pl.program_id(1)
        start = s * row_tile
        if row_tile % 8 == 0:
            start = pl.multiple_of(start, 8)
        enc = enc_ref[pl.ds(start, row_tile), :]
    else:
        enc = enc_ref[...]
    o_ref[...] = (x_ref[...].astype(jnp.float32) + enc).astype(o_ref.dtype)


_LANE_CANDIDATES = (1024, 512, 256, 128)     # lane-dense widths (multiples of 128)
_ENC_RESIDENT_MAX_BYTES = 12 << 20           # keep table VMEM-resident up to ~12 MiB


def _tpu_vmem_capacity_bytes() -> int:
    try:
        return int(pltpu.get_tpu_info().vmem_capacity_bytes)
    except Exception:
        return 64 << 20          # conservative (v7x-sized) default if query fails


@functools.partial(jax.jit, static_argnames=("max_len", "max_tile_bytes"))
def positional_encoding_forward(x: jnp.ndarray, *, max_len: int = 500,
                                max_tile_bytes: int | None = None) -> jnp.ndarray:
    """x: (B, S, D). Returns x + sinusoidal_encoding[:S] (broadcast over batch)."""
    B, S, D = x.shape
    if S > max_len:
        raise ValueError(f"seq_len {S} exceeds max_len {max_len}")

    # ---- generation-gated tile budget ---------------------------------------
    big_vmem = _tpu_vmem_capacity_bytes() >= (100 << 20)      # v5e/v6e: 128 MiB
    tile_bytes = max_tile_bytes if max_tile_bytes is not None else (
        (8 << 20) if big_vmem else (4 << 20))
    vmem_limit = (64 << 20) if big_vmem else (48 << 20)

    # ---- lane-dense flattened layout: (B, S, D) -> (B, Rb, L) ----------------
    SD = S * D
    L = next((c for c in _LANE_CANDIDATES if SD % c == 0), None)
    if L is None:
        # S*D not a multiple of 128: keep D as the lane axis. Always correct,
        # but stores are masked when D < 128.
        # TODO(synk): pad D up to a multiple of 128 for lane-dense stores on odd d_model.
        L = D
    Rb = SD // L                                 # rows per batch element

    # ---- row tile: amortize per-step overhead, stay well inside VMEM --------
    target_rows = max(8, (tile_bytes // (L * 4)) // 8 * 8)
    if target_rows >= Rb:
        row_tile = Rb                            # single tile per batch element
    else:
        row_tile = max(8, min(target_rows, (Rb // 8) * 8))
    tiles_per_batch = -(-Rb // row_tile)

    # v7x shards "parallel" grid axes over 2 TensorCores: never leave a
    # single-step grid when it can be split (free for a streaming kernel).
    if B * tiles_per_batch == 1 and Rb >= 16:
        row_tile = (((Rb + 1) // 2) + 7) // 8 * 8
        tiles_per_batch = -(-Rb // row_tile)

    Rb_pad = tiles_per_batch * row_tile

    # ---- precomputed sinusoid table, reshaped/padded to the kernel layout ---
    enc2 = make_positional_encoding(D, S).reshape(Rb, L)       # (Rb, L) float32
    if Rb_pad > Rb:
        # Pad so the in-kernel dynamic slice of the resident table never goes
        # out of bounds on the ragged last tile (padded rows feed dropped rows).
        enc2 = jnp.pad(enc2, ((0, Rb_pad - Rb), (0, 0)))

    enc_resident = (Rb_pad * L * 4) <= _ENC_RESIDENT_MAX_BYTES
    if enc_resident:
        # Constant index_map -> fetched once, stays in VMEM for the whole grid.
        enc_spec = pl.BlockSpec((Rb_pad, L), lambda b, s: (0, 0))
    else:
        enc_spec = pl.BlockSpec((row_tile, L), lambda b, s: (s, 0))   # streamed

    x3 = x.reshape(B, Rb, L)                     # free: contiguous row-major reshape
    out_dtype = jnp.promote_types(x.dtype, jnp.float32)

    kernel = functools.partial(_pos_enc_add_kernel, row_tile=row_tile,
                               enc_resident=enc_resident)

    out3 = pl.pallas_call(
        kernel,
        out_shape=jax.ShapeDtypeStruct((B, Rb, L), out_dtype),
        grid_spec=pltpu.PrefetchScalarGridSpec(
            num_scalar_prefetch=0,
            grid=(B, tiles_per_batch),
            in_specs=[
                pl.BlockSpec((None, row_tile, L), lambda b, s: (b, s, 0)),
                enc_spec,
            ],
            out_specs=pl.BlockSpec((None, row_tile, L), lambda b, s: (b, s, 0)),
        ),
        compiler_params=pltpu.CompilerParams(
            dimension_semantics=("parallel", "parallel"),
            vmem_limit_bytes=vmem_limit,
        ),
    )(x3, enc2)

    return out3.reshape(B, S, D)


if __name__ == "__main__":
    # Shapes consistent with the module's forward: (batch, seq_len, d_model)
    B, S, D = 2, 8, 32
    max_len = 500

    key = jax.random.PRNGKey(0)
    x = jax.random.normal(key, (B, S, D), dtype=jnp.float32)

    out = jax.block_until_ready(positional_encoding_forward(x))
    ref = x + make_positional_encoding(D, max_len)[None, :S, :]
    assert out.shape == (B, S, D)
    assert jnp.allclose(out, ref, atol=1e-5, rtol=1e-5), "mismatch vs reference (primary)"

    # Exercise the multi-tile / ragged-last-tile / padded-table path.
    x2 = jax.random.normal(jax.random.PRNGKey(1), (1, 25, 128), dtype=jnp.float32)
    out2 = jax.block_until_ready(
        positional_encoding_forward(x2, max_tile_bytes=8 * 128 * 4))
    ref2 = x2 + make_positional_encoding(128, max_len)[None, :25, :]
    assert jnp.allclose(out2, ref2, atol=1e-5, rtol=1e-5), "mismatch vs reference (tiled)"

    # Exercise the non-lane-dense fallback (S*D not a multiple of 128).
    x3 = jax.random.normal(jax.random.PRNGKey(2), (2, 5, 6), dtype=jnp.float32)
    out3 = jax.block_until_ready(positional_encoding_forward(x3))
    ref3 = x3 + make_positional_encoding(6, max_len)[None, :5, :]
    assert jnp.allclose(out3, ref3, atol=1e-5, rtol=1e-5), "mismatch vs reference (fallback)"

    print("KERNEL_OK")
</pallas_src>

<mosaic_0001>
module attributes {stable_mosaic.version = 11 : i64} {
  func.func @_pos_enc_add_kernel(%arg0: i32, %arg1: i32, %arg2: memref<1x1x256xf32, #tpu.memory_space<vmem>>, %arg3: memref<1x256xf32, #tpu.memory_space<vmem>>, %arg4: memref<1x1x256xf32, #tpu.memory_space<vmem>>) attributes {dimension_semantics = [#tpu.dimension_semantics<parallel>, #tpu.dimension_semantics<parallel>], iteration_bounds = array<i64: 2, 1>, scalar_prefetch = 0 : i64, scratch_operands = 0 : i64, tpu.core_type = #tpu.core_type<tc>, window_params = [{transform_indices = @transform_0, window_bounds = array<i64: 1, 1, 256>}, {pipeline_mode = #tpu.pipeline_mode<synchronous>, transform_indices = @transform_1, window_bounds = array<i64: 1, 256>}, {transform_indices = @transform_2, window_bounds = array<i64: 1, 1, 256>}]} {
    %c1_i32 = arith.constant 1 : i32
    %0 = arith.muli %arg1, %c1_i32 : i32
    %1 = arith.index_cast %0 : i32 to index
    %c0 = arith.constant 0 : index
    %2 = vector.load %arg3[%1, %c0] : memref<1x256xf32, #tpu.memory_space<vmem>>, vector<1x256xf32>
    %c0_0 = arith.constant 0 : index
    %c0_1 = arith.constant 0 : index
    %c0_2 = arith.constant 0 : index
    %3 = vector.load %arg2[%c0_0, %c0_1, %c0_2] : memref<1x1x256xf32, #tpu.memory_space<vmem>>, vector<1x1x256xf32>
    %4 = vector.shape_cast %3 : vector<1x1x256xf32> to vector<1x256xf32>
    %5 = arith.addf %4, %2 : vector<1x256xf32>
    %c0_3 = arith.constant 0 : index
    %c0_4 = arith.constant 0 : index
    %c0_5 = arith.constant 0 : index
    %6 = vector.load %arg4[%c0_3, %c0_4, %c0_5] : memref<1x1x256xf32, #tpu.memory_space<vmem>>, vector<1x1x256xf32>
    %7 = vector.shape_cast %6 : vector<1x1x256xf32> to vector<1x256xf32>
    %8 = vector.shape_cast %5 : vector<1x256xf32> to vector<1x1x256xf32>
    tpu.vector_store %arg4[%c0_3, %c0_4, %c0_5], %8 {strides = array<i32>} : memref<1x1x256xf32, #tpu.memory_space<vmem>>, vector<1x1x256xf32>,
    return
  }
  func.func @transform_0(%arg0: i32, %arg1: i32) -> (i32, i32, i32) {
    %c0_i32 = arith.constant 0 : i32
    %c0_i32_0 = arith.constant 0 : i32
    return %arg0, %arg1, %c0_i32 : i32, i32, i32
  }
  func.func @transform_1(%arg0: i32, %arg1: i32) -> (i32, i32) {
    %c0_i32 = arith.constant 0 : i32
    %c0_i32_0 = arith.constant 0 : i32
    %c0_i32_1 = arith.constant 0 : i32
    return %c0_i32, %c0_i32_0 : i32, i32
  }
  func.func @transform_2(%arg0: i32, %arg1: i32) -> (i32, i32, i32) {
    %c0_i32 = arith.constant 0 : i32
    %c0_i32_0 = arith.constant 0 : i32
    return %arg0, %arg1, %c0_i32 : i32, i32, i32
  }
}

</mosaic_0001>

<llo_original>
// kernel: positional_encoding_forward.1
$region0: #{positional_encoding_forward.1}
  #allocation0 [shape = 'u32[]', space=smem, size = 0x4, offset = 0x4, fixed_abs, tag = 'smem constant byte address 0x4 - core index']
  #allocation1 [shape = 'u32[144,128]{1,0:T(1,128)}', space=vmem, size = 0x12000, scoped, tag = 'internal scratch']
  %s0 = inlined_call_operand.vmem [shape: f32[2,1,256], index: 0, kind: input, shape index: {}]
  %s1 = inlined_call_operand.vmem [shape: f32[1,256], index: 1, kind: input, shape index: {}]
  %s2 = inlined_call_operand.vmem [shape: f32[2,1,256], index: 2, kind: output, shape index: {}]
  %s3 = sld [smem:[#allocation0]]
  $region41: #{positional_encoding_forward.1} parent=0
    _
  %s5 = ssub.s32 1, %s3
  %s6 = scalar_select 0, %s5, %s3
  loop: start=0, step=1, limit=4
  $region2: #{positional_encoding_forward.1} parent=0 // loop_pre_header
    _
  $region3: #{positional_encoding_forward.1} parent=0 // loop_header
    %s8 = sphi 0, %s12
    %p9 = scmp.ge.s32.totalorder %s8, 4
    %s15 = sphi 0, %s27
    %s16 = sphi 0, %s23
    %s17 = sphi 0, %s15
    %s18 = sphi 0, %s16
    %s19 = sphi 0, %s17
    %s20 = sphi 0, %s18
    %s32 = sphi 0, %s34
    %s35 = sphi 0, %s32
    %s36 = sphi 0, %s35
    %s52 = sphi 0, %s36
    %s56 = sphi 0, %s56
    %s58 = sphi 0, %s56
    %s59 = sphi 0, %s58
    %s73 = sphi 0, %s59
    %s81 = sphi 0, %s83
    %s84 = sphi 0, %s81
    %s85 = sphi 0, %s84
    %s101 = sphi 0, %s85
  $region4: #{positional_encoding_forward.1} parent=0 // loop_header_branch
    %11 = sbr.rel (%p9) target = $region8
  $region5: #{positional_encoding_forward.1} parent=0 // loop_body
    %s13 = ssub.s32 %s8, 1
    %s14 = ssub.s32 %s8, 2
    %s21 = sadd.s32 1, %s16
    %p22 = scmp.ge.s32.totalorder %s21, 1
    %s23 = scalar_select %p22, 0, %s21
    %s24 = sadd.s32 1, %s15
    %s25 = scalar_select %p22, %s24, %s15
    %p26 = scmp.ge.s32.totalorder %s25, 2
    %s27 = scalar_select %p26, 0, %s25
    %s28 = ssub.s32 %s15, %s27
    %s29 = ssub.s32 %s16, %s23
    %s30 = sor.u32 %s28, %s29
    %p31 = scmp.eq.s32.totalorder %s30, 0
    %s33 = sadd.s32 %s32, 1
    %s34 = scalar_select %p31, %s32, %s33
    %p37 = pneg %p31
    %p38 = scmp.eq.s32.totalorder %s8, 1
    %p39 = por %p37, %p38
    %p40 = scmp.ne.s32.totalorder %s32, %s35
    %p41 = scmp.eq.s32.totalorder %s8, 0
    %p42 = por %p40, %p41
    %p43 = scmp.ne.s32.totalorder %s32, %s35
    %p44 = scmp.eq.s32.totalorder %s13, 1
    %p45 = por %p43, %p44
    %p46 = scmp.ne.s32.totalorder %s35, %s36
    %p47 = scmp.eq.s32.totalorder %s13, 0
    %p48 = por %p46, %p47
    %p49 = scmp.ne.s32.totalorder %s35, %s36
    %p50 = scmp.eq.s32.totalorder %s14, 1
    %p51 = por %p49, %p50
    %p53 = scmp.ne.s32.totalorder %s36, %s52
    %p54 = scmp.eq.s32.totalorder %s14, 0
    %p55 = por %p53, %p54
    %s57 = sadd.s32 %s56, 1
    %p60 = scmp.eq.s32.totalorder %s8, 1
    %p61 = scmp.ne.s32.totalorder %s56, %s58
    %p62 = scmp.eq.s32.totalorder %s8, 0
    %p63 = por %p61, %p62
    %p64 = scmp.ne.s32.totalorder %s56, %s58
    %p65 = scmp.eq.s32.totalorder %s13, 1
    %p66 = por %p64, %p65
    %p67 = scmp.ne.s32.totalorder %s58, %s59
    %p68 = scmp.eq.s32.totalorder %s13, 0
    %p69 = por %p67, %p68
    %p70 = scmp.ne.s32.totalorder %s58, %s59
    %p71 = scmp.eq.s32.totalorder %s14, 1
    %p72 = por %p70, %p71
    %p74 = scmp.ne.s32.totalorder %s59, %s73
    %p75 = scmp.eq.s32.totalorder %s14, 0
    %p76 = por %p74, %p75
    %s77 = ssub.s32 %s15, %s27
    %s78 = ssub.s32 %s16, %s23
    %s79 = sor.u32 %s77, %s78
    %p80 = scmp.eq.s32.totalorder %s79, 0
    %s82 = sadd.s32 %s81, 1
    %s83 = scalar_select %p80, %s81, %s82
    %p86 = pneg %p80
    %p87 = scmp.eq.s32.totalorder %s8, 1
    %p88 = por %p86, %p87
    %p89 = scmp.ne.s32.totalorder %s81, %s84
    %p90 = scmp.eq.s32.totalorder %s8, 0
    %p91 = por %p89, %p90
    %p92 = scmp.ne.s32.totalorder %s81, %s84
    %p93 = scmp.eq.s32.totalorder %s13, 1
    %p94 = por %p92, %p93
    %p95 = scmp.ne.s32.totalorder %s84, %s85
    %p96 = scmp.eq.s32.totalorder %s13, 0
    %p97 = por %p95, %p96
    %p98 = scmp.ne.s32.totalorder %s84, %s85
    %p99 = scmp.eq.s32.totalorder %s14, 1
    %p100 = por %p98, %p99
    %p102 = scmp.ne.s32.totalorder %s85, %s101
    %p103 = scmp.eq.s32.totalorder %s14, 0
    %p104 = por %p102, %p103
    %p105 = scmp.le.s32.totalorder 1, %s8
    %p106 = scmp.lt.s32.totalorder %s8, 3
    %p107 = pnand %p105, %p106
    %p108 = pneg %p107
    // Predicated region
    $region9: #{positional_encoding_forward.1} parent=5 // pred_check
      _
    $region10: #{positional_encoding_forward.1} parent=5 // pred_check_branch
      %110 = sbr.rel (%p107) target = $region12
    $region11: #{positional_encoding_forward.1} parent=5 // pred_region
      %s111 = ssub.s32 %s8, 1
      // Predicated region
      $region13: #{positional_encoding_forward.1} parent=11 // pred_check
        %p112 = pneg %p69
      $region14: #{positional_encoding_forward.1} parent=11 // pred_check_branch
        %114 = sbr.rel (%p112) target = $region16
      $region15: #{positional_encoding_forward.1} parent=11 // pred_region
        _
      $region16: #{positional_encoding_forward.1} parent=11 // pred_fallthru
        _
    $region12: #{positional_encoding_forward.1} parent=5 // pred_fallthru
      _
    %p115 = scmp.lt.s32.totalorder %s8, 2
    // Predicated region
    $region17: #{positional_encoding_forward.1} parent=5 // pred_check
      %p116 = pneg %p115
    $region18: #{positional_encoding_forward.1} parent=5 // pred_check_branch
      %118 = sbr.rel (%p116) target = $region20
    $region19: #{positional_encoding_forward.1} parent=5 // pred_region
      // Predicated region
      $region21: #{positional_encoding_forward.1} parent=19 // pred_check
        %p119 = pneg %p42
      $region22: #{positional_encoding_forward.1} parent=19 // pred_check_branch
        %121 = sbr.rel (%p119) target = $region24
      $region23: #{positional_encoding_forward.1} parent=19 // pred_region
        %p122 = scmp.lt.s32.totalorder %s15, 1
        %s123 = scalar_select %p122, %s15, 1
        %p124 = scmp.lt.s32.totalorder %s16, 0
        %s125 = scalar_select %p124, %s16, 0
        %s126 = smul.addr %s125, 2
        %s127 = smul.addr %s123, 2
        %s128 = sadd.s32 %s126, %s127
        %s129 = scalar_lea.vmem %s0, %s128
      $region24: #{positional_encoding_forward.1} parent=19 // pred_fallthru
        _
    $region20: #{positional_encoding_forward.1} parent=5 // pred_fallthru
      _
    %p130 = scmp.le.s32.totalorder 1, %s8
    %p131 = scmp.lt.s32.totalorder %s8, 3
    %p132 = pnand %p130, %p131
    %p133 = pneg %p132
    // Predicated region
    $region25: #{positional_encoding_forward.1} parent=5 // pred_check
      _
    $region26: #{positional_encoding_forward.1} parent=5 // pred_check_branch
      %135 = sbr.rel (%p132) target = $region28
    $region27: #{positional_encoding_forward.1} parent=5 // pred_region
      %s136 = ssub.s32 %s8, 1
      %p137 = scmp.lt.s32.totalorder %s17, 1
      %s138 = scalar_select %p137, %s17, 1
      %p139 = scmp.lt.s32.totalorder %s18, 0
      %s140 = scalar_select %p139, %s18, 0
      %s141 = smul.addr %s140, 2
      %s142 = smul.addr %s138, 2
      %s143 = sadd.s32 %s141, %s142
      %s144 = scalar_lea.vmem %s0, %s143
      %p145 = pneg %p48
      %p146 = pneg %p45
      %p147 = pneg %p69
      %p148 = pneg %p66
      %p149 = pneg %p97
      %p150 = pneg %p94
      %p151 = scmp.lt.s32.totalorder %s17, 1
      %s152 = scalar_select %p151, %s17, 1
      %p153 = scmp.lt.s32.totalorder %s18, 0
      %s154 = scalar_select %p153, %s18, 0
      %s155 = smul.addr %s154, 2
      %s156 = smul.addr %s152, 2
      %s157 = sadd.s32 %s155, %s156
      %s158 = scalar_lea.vmem %s2, %s157
      %p159 = scmp.lt.s32.totalorder %s17, 1
      %s160 = scalar_select %p159, %s17, 1
      %p161 = scmp.lt.s32.totalorder %s18, 0
      %s162 = scalar_select %p161, %s18, 0
      %s163 = smul.addr %s162, 2
      %s164 = smul.addr %s160, 2
      %s165 = sadd.s32 %s163, %s164
      %s166 = scalar_lea.vmem %s0, %s165
      %p167 = scmp.lt.s32.totalorder %s17, 1
      %s168 = scalar_select %p167, %s17, 1
      %p169 = scmp.lt.s32.totalorder %s18, 0
      %s170 = scalar_select %p169, %s18, 0
      %s171 = smul.addr %s170, 2
      %s172 = smul.addr %s168, 2
      %s173 = sadd.s32 %s171, %s172
      %s174 = scalar_lea.vmem %s2, %s173
      %s175 = smul.u32 %s18, 2
      %s176 = scalar_lea.vmem %s1, %s175
      %v177 = vld [vmem:[%s176] sm:$0x3]
      %v178 = vld [vmem:[%s166] sm:$0x3]
      %v179 = vadd.f32 %v178, %v177
      %v180 = vlaneseq
      %vm181 = vcmp.ge.s32.totalorder %v180, 0
      %vm182 = vcmp.lt.s32.totalorder %v180, 256
      %vm183 = vmand %vm181, %vm182
      %184 = vst.msk [vmem:[%s174] sm:$0x3] %vm183, %v179
      %p185 = scmp.lt.s32.totalorder %s17, 1
      %s186 = scalar_select %p185, %s17, 1
      %p187 = scmp.lt.s32.totalorder %s18, 0
      %s188 = scalar_select %p187, %s18, 0
      %s189 = smul.addr %s188, 2
      %s190 = smul.addr %s186, 2
      %s191 = sadd.s32 %s189, %s190
      %s192 = scalar_lea.vmem %s2, %s191
      // Predicated region
      $region29: #{positional_encoding_forward.1} parent=27 // pred_check
        %p193 = pneg %p94
      $region30: #{positional_encoding_forward.1} parent=27 // pred_check_branch
        %195 = sbr.rel (%p193) target = $region32
      $region31: #{positional_encoding_forward.1} parent=27 // pred_region
        _
      $region32: #{positional_encoding_forward.1} parent=27 // pred_fallthru
        _
    $region28: #{positional_encoding_forward.1} parent=5 // pred_fallthru
      _
    %p196 = scmp.le.s32.totalorder 2, %s8
    // Predicated region
    $region33: #{positional_encoding_forward.1} parent=5 // pred_check
      %p197 = pneg %p196
    $region34: #{positional_encoding_forward.1} parent=5 // pred_check_branch
      %199 = sbr.rel (%p197) target = $region36
    $region35: #{positional_encoding_forward.1} parent=5 // pred_region
      %s200 = ssub.s32 %s8, 2
      // Predicated region
      $region37: #{positional_encoding_forward.1} parent=35 // pred_check
        %p201 = pneg %p100
      $region38: #{positional_encoding_forward.1} parent=35 // pred_check_branch
        %203 = sbr.rel (%p201) target = $region40
      $region39: #{positional_encoding_forward.1} parent=35 // pred_region
        %p204 = scmp.lt.s32.totalorder %s19, 1
        %s205 = scalar_select %p204, %s19, 1
        %p206 = scmp.lt.s32.totalorder %s20, 0
        %s207 = scalar_select %p206, %s20, 0
        %s208 = smul.addr %s207, 2
        %s209 = smul.addr %s205, 2
        %s210 = sadd.s32 %s208, %s209
        %s211 = scalar_lea.vmem %s2, %s210
      $region40: #{positional_encoding_forward.1} parent=35 // pred_fallthru
        _
    $region36: #{positional_encoding_forward.1} parent=5 // pred_fallthru
      _
  $region6: #{positional_encoding_forward.1} parent=0 // loop_footer
    %s12 = sadd.s32 1, %s8
  $region7: #{positional_encoding_forward.1} parent=0 // loop_footer_branch
    %7 = sbr.rel target = $region3
  $region8: #{positional_encoding_forward.1} parent=0 // loop_exit
    _

</llo_original>
